<compile_context>
chip_gen: v6e
topology: v6e:2x2x1
jax: 0.10.0
libtpu: 0.0.40
codegen_flags: <defaults>
</compile_context>

<pallas_src>
import jax
import jax.numpy as jnp
from jax.experimental import pallas as pl
from jax.experimental.pallas import tpu as pltpu


def _round_up(x, m):
    return ((x + m - 1) // m) * m


def _triplet_dist_kernel(a_ref, p_ref, n_ref, d_ref):
    a = a_ref[...].astype(jnp.float32)
    p = p_ref[...].astype(jnp.float32)
    n = n_ref[...].astype(jnp.float32)

    # torch cosine_similarity eps = 1e-8; clamp applied on the squared norms.
    eps2 = jnp.float32(1e-16)

    saa = jnp.sum(a * a, axis=-1, keepdims=True)  # (TB, 1)
    spp = jnp.sum(p * p, axis=-1, keepdims=True)
    snn = jnp.sum(n * n, axis=-1, keepdims=True)
    sap = jnp.sum(a * p, axis=-1, keepdims=True)
    san = jnp.sum(a * n, axis=-1, keepdims=True)

    inv_a = jax.lax.rsqrt(jnp.maximum(saa, eps2))  # EUP, own VLIW slot
    inv_p = jax.lax.rsqrt(jnp.maximum(spp, eps2))
    inv_n = jax.lax.rsqrt(jnp.maximum(snn, eps2))

    dp = 1.0 - sap * (inv_a * inv_p)  # distance_positive
    dn = 1.0 - san * (inv_a * inv_n)  # distance_negative
    d_ref[...] = jnp.concatenate([dp, dn], axis=-1)  # (TB, 2)


def _vmem_input_budget_bytes():
    """Per-generation budget for the double-buffered input working set."""
    kind = ""
    try:
        kind = jax.devices()[0].device_kind.lower()
    except Exception:
        pass
    if ("v6" in kind) or ("v7" in kind):
        # v6e/v7x: 32 MiB scoped-VMEM default -> ~24 MiB for inputs.
        return 24 * 1024 * 1024
    # v5e (and unknown chips): 16 MiB scoped default -> stay conservative.
    return 10 * 1024 * 1024


def _choose_block_rows(B, D, input_budget_bytes, itemsize):
    """Pick a batch tile TB (multiple of 8).

    - Sized by bytes against the lane-padded feature dim (real VMEM footprint
      of a (TB, D) block is TB * round_up(D, 128) * itemsize).
    - Capped so the batch grid has >= 2 steps when B allows (megacore on v7x).
    """
    d_pad = _round_up(max(D, 1), 128)
    bytes_per_row = 3 * 2 * itemsize * d_pad  # 3 inputs x double-buffer
    tb = max(8, (input_budget_bytes // bytes_per_row) // 8 * 8)

    # Guarantee >= 2 grid steps when the batch is big enough to split.
    if B >= 16:
        tb_split = _round_up(pl.cdiv(B, 2), 8)
        tb = min(tb, tb_split)

    b_pad8 = _round_up(B, 8)
    return min(tb, b_pad8)


def triplet_loss(anchor, positive, negative, margin):
    """Returns (mean_loss_scalar, distance_positive[B], distance_negative[B])."""
    B, D = anchor.shape
    itemsize = jnp.dtype(anchor.dtype).itemsize
    budget = _vmem_input_budget_bytes()
    TB = _choose_block_rows(B, D, budget, itemsize)
    grid = (pl.cdiv(B, TB),)  # ragged last block handled by Pallas, no jnp.pad

    # Explicit scoped-VMEM limit from the actual tile footprint + slack.
    d_pad = _round_up(D, 128)
    in_bytes = 3 * 2 * TB * d_pad * itemsize           # double-buffered inputs
    out_bytes = 2 * TB * 128 * 4                       # double-buffered (TB,2) out, lane-padded
    vmem_limit = max(in_bytes + out_bytes + (4 << 20), 16 << 20)

    dists = pl.pallas_call(
        _triplet_dist_kernel,
        out_shape=jax.ShapeDtypeStruct((B, 2), jnp.float32),
        grid=grid,
        in_specs=[
            pl.BlockSpec((TB, D), lambda i: (i, 0)),
            pl.BlockSpec((TB, D), lambda i: (i, 0)),
            pl.BlockSpec((TB, D), lambda i: (i, 0)),
        ],
        out_specs=pl.BlockSpec((TB, 2), lambda i: (i, 0)),
        compiler_params=pltpu.CompilerParams(
            dimension_semantics=("parallel",),
            vmem_limit_bytes=int(vmem_limit),
        ),
    )(anchor, positive, negative)

    dp = dists[:, 0]
    dn = dists[:, 1]
    # Scalar hinge + mean is a trivial (B,)-length reduction; done in JAX so
    # the batch grid axis stays fully parallel.
    loss = jnp.mean(jnp.maximum(dp - dn + jnp.float32(margin), 0.0))
    return loss, dp, dn


def _ref_dist(x1, x2):
    eps = 1e-8
    num = jnp.sum(x1 * x2, axis=-1)
    den = jnp.maximum(jnp.linalg.norm(x1, axis=-1), eps) * jnp.maximum(
        jnp.linalg.norm(x2, axis=-1), eps
    )
    return 1.0 - num / den


def _check(B, D, margin, key):
    k1, k2, k3 = jax.random.split(key, 3)
    anchor = jax.random.normal(k1, (B, D), dtype=jnp.float32)
    positive = jax.random.normal(k2, (B, D), dtype=jnp.float32)
    negative = jax.random.normal(k3, (B, D), dtype=jnp.float32)

    loss, dp, dn = triplet_loss(anchor, positive, negative, margin)
    jax.block_until_ready((loss, dp, dn))

    dp_ref = _ref_dist(anchor, positive)
    dn_ref = _ref_dist(anchor, negative)
    loss_ref = jnp.mean(jnp.maximum(dp_ref - dn_ref + margin, 0.0))

    assert jnp.allclose(dp, dp_ref, atol=1e-5), (B, D)
    assert jnp.allclose(dn, dn_ref, atol=1e-5), (B, D)
    assert jnp.allclose(loss, loss_ref, atol=1e-5), (B, D)


if __name__ == "__main__":
    key = jax.random.PRNGKey(0)
    k_a, k_b = jax.random.split(key)

    # Small shape implied by the module (single block, full-row tile).
    _check(B=8, D=32, margin=0.5, key=k_a)
    # Exercises the multi-step grid + ragged last block (no padding copies).
    _check(B=20, D=256, margin=0.2, key=k_b)

    print("KERNEL_OK")
</pallas_src>

<mosaic_0001>
module attributes {stable_mosaic.version = 11 : i64} {
  func.func @_triplet_dist_kernel(%arg0: i32, %arg1: memref<8x32xf32, #tpu.memory_space<vmem>>, %arg2: memref<8x32xf32, #tpu.memory_space<vmem>>, %arg3: memref<8x32xf32, #tpu.memory_space<vmem>>, %arg4: memref<8x2xf32, #tpu.memory_space<vmem>>) attributes {dimension_semantics = [#tpu.dimension_semantics<parallel>], iteration_bounds = array<i64: 1>, scalar_prefetch = 0 : i64, scratch_operands = 0 : i64, tpu.core_type = #tpu.core_type<tc>, window_params = [{transform_indices = @transform_0, window_bounds = array<i64: 8, 32>}, {transform_indices = @transform_1, window_bounds = array<i64: 8, 32>}, {transform_indices = @transform_2, window_bounds = array<i64: 8, 32>}, {transform_indices = @transform_3, window_bounds = array<i64: 8, 2>}]} {
    %c0 = arith.constant 0 : index
    %c0_0 = arith.constant 0 : index
    %0 = vector.load %arg1[%c0, %c0_0] : memref<8x32xf32, #tpu.memory_space<vmem>>, vector<8x32xf32>
    %c0_1 = arith.constant 0 : index
    %c0_2 = arith.constant 0 : index
    %1 = vector.load %arg2[%c0_1, %c0_2] : memref<8x32xf32, #tpu.memory_space<vmem>>, vector<8x32xf32>
    %c0_3 = arith.constant 0 : index
    %c0_4 = arith.constant 0 : index
    %2 = vector.load %arg3[%c0_3, %c0_4] : memref<8x32xf32, #tpu.memory_space<vmem>>, vector<8x32xf32>
    %3 = arith.mulf %0, %0 : vector<8x32xf32>
    %cst = arith.constant dense<0.000000e+00> : vector<8xf32>
    %4 = vector.multi_reduction <add>, %3, %cst [1] : vector<8x32xf32> to vector<8xf32>
    %5 = vector.shape_cast %4 : vector<8xf32> to vector<8x1xf32>
    %6 = arith.mulf %1, %1 : vector<8x32xf32>
    %cst_5 = arith.constant dense<0.000000e+00> : vector<8xf32>
    %7 = vector.multi_reduction <add>, %6, %cst_5 [1] : vector<8x32xf32> to vector<8xf32>
    %8 = vector.shape_cast %7 : vector<8xf32> to vector<8x1xf32>
    %9 = arith.mulf %2, %2 : vector<8x32xf32>
    %cst_6 = arith.constant dense<0.000000e+00> : vector<8xf32>
    %10 = vector.multi_reduction <add>, %9, %cst_6 [1] : vector<8x32xf32> to vector<8xf32>
    %11 = vector.shape_cast %10 : vector<8xf32> to vector<8x1xf32>
    %12 = arith.mulf %0, %1 : vector<8x32xf32>
    %cst_7 = arith.constant dense<0.000000e+00> : vector<8xf32>
    %13 = vector.multi_reduction <add>, %12, %cst_7 [1] : vector<8x32xf32> to vector<8xf32>
    %14 = vector.shape_cast %13 : vector<8xf32> to vector<8x1xf32>
    %15 = arith.mulf %0, %2 : vector<8x32xf32>
    %cst_8 = arith.constant dense<0.000000e+00> : vector<8xf32>
    %16 = vector.multi_reduction <add>, %15, %cst_8 [1] : vector<8x32xf32> to vector<8xf32>
    %17 = vector.shape_cast %16 : vector<8xf32> to vector<8x1xf32>
    %cst_9 = arith.constant 1.000000e-16 : f32
    %18 = vector.broadcast %cst_9 : f32 to vector<8x1xf32>
    %19 = arith.maximumf %5, %18 : vector<8x1xf32>
    %20 = math.rsqrt %19 : vector<8x1xf32>
    %cst_10 = arith.constant 1.000000e-16 : f32
    %21 = vector.broadcast %cst_10 : f32 to vector<8x1xf32>
    %22 = arith.maximumf %8, %21 : vector<8x1xf32>
    %23 = math.rsqrt %22 : vector<8x1xf32>
    %cst_11 = arith.constant 1.000000e-16 : f32
    %24 = vector.broadcast %cst_11 : f32 to vector<8x1xf32>
    %25 = arith.maximumf %11, %24 : vector<8x1xf32>
    %26 = math.rsqrt %25 : vector<8x1xf32>
    %27 = arith.mulf %20, %23 : vector<8x1xf32>
    %28 = arith.mulf %14, %27 : vector<8x1xf32>
    %cst_12 = arith.constant 1.000000e+00 : f32
    %29 = vector.broadcast %cst_12 : f32 to vector<8x1xf32>
    %30 = arith.subf %29, %28 : vector<8x1xf32>
    %31 = arith.mulf %20, %26 : vector<8x1xf32>
    %32 = arith.mulf %17, %31 : vector<8x1xf32>
    %cst_13 = arith.constant 1.000000e+00 : f32
    %33 = vector.broadcast %cst_13 : f32 to vector<8x1xf32>
    %34 = arith.subf %33, %32 : vector<8x1xf32>
    %35 = tpu.concatenate %30, %34 in 1 : vector<8x1xf32>, vector<8x1xf32> -> vector<8x2xf32>
    %c0_14 = arith.constant 0 : index
    %c0_15 = arith.constant 0 : index
    %36 = vector.load %arg4[%c0_14, %c0_15] : memref<8x2xf32, #tpu.memory_space<vmem>>, vector<8x2xf32>
    tpu.vector_store %arg4[%c0_14, %c0_15], %35 {strides = array<i32>} : memref<8x2xf32, #tpu.memory_space<vmem>>, vector<8x2xf32>,
    return
  }
  func.func @transform_0(%arg0: i32) -> (i32, i32) {
    %c0_i32 = arith.constant 0 : i32
    %c0_i32_0 = arith.constant 0 : i32
    return %arg0, %c0_i32 : i32, i32
  }
  func.func @transform_1(%arg0: i32) -> (i32, i32) {
    %c0_i32 = arith.constant 0 : i32
    %c0_i32_0 = arith.constant 0 : i32
    return %arg0, %c0_i32 : i32, i32
  }
  func.func @transform_2(%arg0: i32) -> (i32, i32) {
    %c0_i32 = arith.constant 0 : i32
    %c0_i32_0 = arith.constant 0 : i32
    return %arg0, %c0_i32 : i32, i32
  }
  func.func @transform_3(%arg0: i32) -> (i32, i32) {
    %c0_i32 = arith.constant 0 : i32
    %c0_i32_0 = arith.constant 0 : i32
    return %arg0, %c0_i32 : i32, i32
  }
}

</mosaic_0001>

<llo_original>
// kernel: tpu_custom_call.1
$region0: #{tpu_custom_call.1}
  #allocation0 [shape = 'u32[]', space=smem, size = 0x4, offset = 0x4, fixed_abs, tag = 'smem constant byte address 0x4 - core index']
  #allocation1 [shape = 'u32[144,128]{1,0:T(1,128)}', space=vmem, size = 0x12000, scoped, tag = 'internal scratch']
  %s0 = inlined_call_operand.hbm [shape: f32[8,32], index: 0, kind: input, shape index: {}]
  %s1 = inlined_call_operand.hbm [shape: f32[8,32], index: 1, kind: input, shape index: {}]
  %s2 = inlined_call_operand.hbm [shape: f32[8,32], index: 2, kind: input, shape index: {}]
  %s3 = inlined_call_operand.vmem [shape: f32[8,2], index: 3, kind: output, shape index: {}]
  %s4 = sld [smem:[#allocation0]]
  $region34: #{tpu_custom_call.1} parent=0
    _
  %s6 = ssub.s32 1, %s4
  %s7 = scalar_select 0, %s6, %s4
  $region1: #{tpu_custom_call.1} parent=0
    #allocation2 [shape = 'u8[4096]{0}', space=vmem, size = 0x1000, scoped, tag = 'input window, operand 0, single buffered']
    #allocation3 [shape = 's32[1]{0}', space=sflag, size = 0x4, scoped, tag = 'scoped memory for tpu_custom_call.1']
    #allocation4 [shape = 'u8[4096]{0}', space=vmem, size = 0x1000, scoped, tag = 'input window, operand 1, single buffered']
    #allocation5 [shape = 's32[1]{0}', space=sflag, size = 0x4, scoped, tag = 'scoped memory for tpu_custom_call.1']
    #allocation6 [shape = 'u8[4096]{0}', space=vmem, size = 0x1000, scoped, tag = 'input window, operand 2, single buffered']
    %8 = vsyncpa [#allocation3], 0
    %9 = vsyncpa [#allocation5], 0
    // Predicated region
    $region2: #{tpu_custom_call.1} parent=1 // pred_check
      _
    $region3: #{tpu_custom_call.1} parent=1 // pred_check_branch
      %11 = sbr.rel (0) target = $region5
    $region4: #{tpu_custom_call.1} parent=1 // pred_region
      %s13 = ssub.s32 128, 128
      %14 = vsyncadd [#allocation3], %s13
      %s16 = sshll.u32 [#allocation2], 4
      %s17 = int_to_ptr.vmem [resolvable:$true] %s16
      %19 = dma.hbm_to_vmem [thread:$0]  %s0, 128, %s17, [#allocation3]
    $region5: #{tpu_custom_call.1} parent=1 // pred_fallthru
      _
    // Predicated region
    $region6: #{tpu_custom_call.1} parent=1 // pred_check
      _
    $region7: #{tpu_custom_call.1} parent=1 // pred_check_branch
      %21 = sbr.rel (0) target = $region9
    $region8: #{tpu_custom_call.1} parent=1 // pred_region
      %s23 = ssub.s32 128, 128
      %24 = vsyncadd [#allocation5], %s23
      %s26 = sshll.u32 [#allocation4], 4
      %s27 = int_to_ptr.vmem [resolvable:$true] %s26
      %29 = dma.hbm_to_vmem [thread:$0]  %s1, 128, %s27, [#allocation5]
    $region9: #{tpu_custom_call.1} parent=1 // pred_fallthru
      _
    // Predicated region
    $region10: #{tpu_custom_call.1} parent=1 // pred_check
      _
    $region11: #{tpu_custom_call.1} parent=1 // pred_check_branch
      %31 = sbr.rel (0) target = $region13
    $region12: #{tpu_custom_call.1} parent=1 // pred_region
      %s33 = ssub.s32 128, 128
      %34 = vsyncadd [#allocation5], %s33
      %s36 = sshll.u32 [#allocation6], 4
      %s37 = int_to_ptr.vmem [resolvable:$true] %s36
      %39 = dma.hbm_to_vmem [thread:$0]  %s2, 128, %s37, [#allocation5]
    $region13: #{tpu_custom_call.1} parent=1 // pred_fallthru
      _
    // Predicated region
    $region14: #{tpu_custom_call.1} parent=1 // pred_check
      _
    $region15: #{tpu_custom_call.1} parent=1 // pred_check_branch
      %41 = sbr.rel (0) target = $region17
    $region16: #{tpu_custom_call.1} parent=1 // pred_region
      %42 = dma.done [#allocation3], 128
    $region17: #{tpu_custom_call.1} parent=1 // pred_fallthru
      _
    // Predicated region
    $region18: #{tpu_custom_call.1} parent=1 // pred_check
      _
    $region19: #{tpu_custom_call.1} parent=1 // pred_check_branch
      %44 = sbr.rel (0) target = $region21
    $region20: #{tpu_custom_call.1} parent=1 // pred_region
      %45 = dma.done [#allocation5], 128
    $region21: #{tpu_custom_call.1} parent=1 // pred_fallthru
      _
    // Predicated region
    $region22: #{tpu_custom_call.1} parent=1 // pred_check
      _
    $region23: #{tpu_custom_call.1} parent=1 // pred_check_branch
      %47 = sbr.rel (0) target = $region25
    $region24: #{tpu_custom_call.1} parent=1 // pred_region
      %48 = dma.done [#allocation5], 128
    $region25: #{tpu_custom_call.1} parent=1 // pred_fallthru
      _
    %v49 = vld [vmem:[#allocation2] sm:$0xff]
    %v50 = vld [vmem:[#allocation4] sm:$0xff]
    %v51 = vld [vmem:[#allocation6] sm:$0xff]
    %v52 = vmul.f32 %v49, %v49
    %vm53 = vcmask 261120
    %v54 = vsel %vm53, %v52, 0.0
    %55 = vadd.xlane.f32.xlu0 %v54
    %v56 = vpop.xlane.xlu0 %55
    %v57 = vmul.f32 %v50, %v50
    %v58 = vsel %vm53, %v57, 0.0
    %59 = vadd.xlane.f32.xlu0 %v58
    %v60 = vpop.xlane.xlu0 %59
    %v61 = vmul.f32 %v51, %v51
    %v62 = vsel %vm53, %v61, 0.0
    %63 = vadd.xlane.f32.xlu0 %v62
    %v64 = vpop.xlane.xlu0 %63
    %v65 = vmul.f32 %v49, %v50
    %v66 = vsel %vm53, %v65, 0.0
    %67 = vadd.xlane.f32.xlu0 %v66
    %v68 = vpop.xlane.xlu0 %67
    %v69 = vmul.f32 %v49, %v51
    %v70 = vsel %vm53, %v69, 0.0
    %71 = vadd.xlane.f32.xlu0 %v70
    %v72 = vpop.xlane.xlu0 %71
    %v73 = vmax.f32 %v56, 1e-16
    %v74 = vrsqrt.pop %v73
    %v75 = vmax.f32 %v60, 1e-16
    %v76 = vrsqrt.pop %v75
    %v77 = vmax.f32 %v64, 1e-16
    %v78 = vrsqrt.pop %v77
    %v79 = vmul.f32 %v74, %v76
    %v80 = vmul.f32 %v68, %v79
    %v81 = vsub.f32 1.0, %v80
    %v82 = vmul.f32 %v74, %v78
    %v83 = vmul.f32 %v72, %v82
    %v84 = vsub.f32 1.0, %v83
    %vm85 = vcmask 7168
    %v86 = vsel %vm85, %v81, %v84
    %vm87 = vcmask 15360
    %88 = vst.msk [vmem:[%s3] sm:$0xff] %vm87, %v86
    // Predicated region
    $region26: #{tpu_custom_call.1} parent=1 // pred_check
      _
    $region27: #{tpu_custom_call.1} parent=1 // pred_check_branch
      %90 = sbr.rel (0) target = $region29
    $region28: #{tpu_custom_call.1} parent=1 // pred_region
      _
    $region29: #{tpu_custom_call.1} parent=1 // pred_fallthru
      _
    // Predicated region
    $region30: #{tpu_custom_call.1} parent=1 // pred_check
      _
    $region31: #{tpu_custom_call.1} parent=1 // pred_check_branch
      %92 = sbr.rel (0) target = $region33
    $region32: #{tpu_custom_call.1} parent=1 // pred_region
      _
    $region33: #{tpu_custom_call.1} parent=1 // pred_fallthru
      _
    %93 = vsyncpa [#allocation3], 1
    %94 = vsyncpa [#allocation5], 1

</llo_original>
